<compile_context>
chip_gen: v7x
topology: tpu7x:2x2x1
jax: 0.10.0
libtpu: 0.0.40
codegen_flags: <defaults>
</compile_context>

<pallas_src>
import jax
import jax.numpy as jnp
from jax.experimental import pallas as pl
from jax.experimental.pallas import tpu as pltpu


def _round_up(x, m):
    return ((x + m - 1) // m) * m


def _choose_tm(n, c, itemsize):
    # Sublane alignment: 8 rows for 4-byte dtypes, 16 for 2-byte, 32 for 1-byte.
    align = 8 * max(1, 4 // itemsize)
    # ~8 MiB per pred buffer -> ~16 MiB double-buffered; fits the default scoped
    # VMEM on v6e/v7x (32 MiB) and the explicitly raised limit on v5e.
    budget = 8 * 1024 * 1024
    tm = budget // max(1, c * itemsize)
    tm = max(align, (tm // align) * align)
    tm = min(tm, 1024, _round_up(n, align))
    return tm


def _make_kernel(tm, c, n, smoothing):
    inv_n = 1.0 / float(n)
    smooth_inv_nc = float(smoothing) / float(n * c)
    cf = float(c)

    def kernel(pred_ref, tgt_ref, out_ref):
        # pred_ref: (tm, c) logits (native dtype) in VMEM; upcast per tile.
        x = pred_ref[...].astype(jnp.float32)                     # (tm, c)
        tgt = tgt_ref[...]                                        # (tm, 1) int32

        # Numerically stable per-row log-sum-exp pieces (logp never built).
        m = jnp.max(x, axis=-1, keepdims=True)                    # (tm, 1)
        lse = jnp.log(jnp.sum(jnp.exp(x - m), axis=-1, keepdims=True))
        m_lse = m + lse                                           # (tm, 1)

        row_sum = jnp.sum(x, axis=-1, keepdims=True)              # (tm, 1)

        # Target logit via select + row-reduce (no onehot cast/multiply).
        col = jax.lax.broadcasted_iota(jnp.int32, (tm, c), 1)
        x_t = jnp.sum(jnp.where(col == tgt, x, 0.0), axis=-1, keepdims=True)

        ce_row = m_lse - x_t                    # -log_softmax(x)[target]
        reg_row = row_sum - cf * m_lse          # sum_c log_softmax(x)_c

        # Per-row contribution to the final scalar loss.  Rows padded past N
        # (last tile) produce row-local garbage whose writes are discarded.
        out_ref[...] = ce_row * inv_n + reg_row * smooth_inv_nc

    return kernel


def label_smoothing_loss(pred, target, smoothing=0.1, tm=None):
    assert 0 <= smoothing < 1
    n, c = pred.shape
    itemsize = jnp.dtype(pred.dtype).itemsize
    if tm is None:
        tm = _choose_tm(n, c, itemsize)
    nt = pl.cdiv(n, tm)

    tgt2d = target.astype(jnp.int32).reshape(n, 1)

    per_row = pl.pallas_call(
        _make_kernel(tm, c, n, smoothing),
        grid=(nt,),
        out_shape=jax.ShapeDtypeStruct((n, 1), jnp.float32),
        in_specs=[
            pl.BlockSpec((tm, c), lambda i: (i, 0)),   # row tile of logits
            pl.BlockSpec((tm, 1), lambda i: (i, 0)),   # matching label column
        ],
        out_specs=pl.BlockSpec((tm, 1), lambda i: (i, 0)),
        compiler_params=pltpu.CompilerParams(
            # Each grid step owns its own output rows -> safe to parallelize
            # (shards row tiles across the 2 TensorCores on v7x).
            dimension_semantics=("parallel",),
            # Raise v5e's 16 MiB scoped default; equals the default on v6e/v7x.
            vmem_limit_bytes=32 * 1024 * 1024,
        ),
        cost_estimate=pl.CostEstimate(
            flops=7 * n * c,
            transcendentals=n * c + n,
            bytes_accessed=n * c * itemsize + n * 4 + n * 4,
        ),
    )(pred, tgt2d)

    # Tiny final reduction (N scalars) in plain JAX, f32 accumulation.
    return jnp.sum(per_row)


def _reference_loss(pred, target, smoothing=0.1):
    # Pure-JAX reference mirroring the PyTorch module.
    logp = jax.nn.log_softmax(pred.astype(jnp.float32), axis=-1)
    ce = -jnp.mean(jnp.take_along_axis(logp, target[:, None].astype(jnp.int32), axis=-1))
    reg = jnp.mean(logp)
    return ce + smoothing * reg


if __name__ == "__main__":
    key = jax.random.PRNGKey(0)
    k1, k2, k3, k4 = jax.random.split(key, 4)
    smoothing = 0.1

    # Test 1: small f32 batch, lane-aligned class count, single row tile.
    N, C = 8, 128
    pred = jax.random.normal(k1, (N, C), dtype=jnp.float32)
    target = jax.random.randint(k2, (N,), 0, C, dtype=jnp.int32)
    loss = jax.block_until_ready(label_smoothing_loss(pred, target, smoothing))
    ref = _reference_loss(pred, target, smoothing)
    assert jnp.allclose(loss, ref, atol=1e-5, rtol=1e-5), (loss, ref)

    # Test 2: bf16 logits (native-dtype streaming), multi-tile grid, batch not
    # a multiple of the row tile (exercises padded-tail handling).
    N2, C2 = 20, 256
    pred2 = jax.random.normal(k3, (N2, C2), dtype=jnp.float32).astype(jnp.bfloat16)
    target2 = jax.random.randint(k4, (N2,), 0, C2, dtype=jnp.int32)
    loss2 = jax.block_until_ready(label_smoothing_loss(pred2, target2, smoothing, tm=16))
    ref2 = _reference_loss(pred2, target2, smoothing)
    assert jnp.allclose(loss2, ref2, atol=1e-4, rtol=1e-4), (loss2, ref2)

    print("KERNEL_OK")
</pallas_src>

<mosaic_0001>
module attributes {stable_mosaic.version = 11 : i64} {
  func.func @kernel(%arg0: i32, %arg1: memref<8x128xf32, #tpu.memory_space<vmem>>, %arg2: memref<8x1xi32, #tpu.memory_space<vmem>>, %arg3: memref<8x1xf32, #tpu.memory_space<vmem>>) attributes {dimension_semantics = [#tpu.dimension_semantics<parallel>], iteration_bounds = array<i64: 1>, scalar_prefetch = 0 : i64, scratch_operands = 0 : i64, tpu.core_type = #tpu.core_type<tc>, window_params = [{transform_indices = @transform_0, window_bounds = array<i64: 8, 128>}, {transform_indices = @transform_1, window_bounds = array<i64: 8, 1>}, {transform_indices = @transform_2, window_bounds = array<i64: 8, 1>}]} {
    %c0 = arith.constant 0 : index
    %c0_0 = arith.constant 0 : index
    %0 = vector.load %arg1[%c0, %c0_0] : memref<8x128xf32, #tpu.memory_space<vmem>>, vector<8x128xf32>
    %c0_1 = arith.constant 0 : index
    %c0_2 = arith.constant 0 : index
    %1 = vector.load %arg2[%c0_1, %c0_2] : memref<8x1xi32, #tpu.memory_space<vmem>>, vector<8x1xi32>
    %cst = arith.constant dense<0xFF800000> : vector<8xf32>
    %2 = vector.multi_reduction <maximumf>, %0, %cst [1] : vector<8x128xf32> to vector<8xf32>
    %3 = vector.shape_cast %2 : vector<8xf32> to vector<8x1xf32>
    %4 = vector.broadcast %3 : vector<8x1xf32> to vector<8x128xf32>
    %5 = arith.subf %0, %4 : vector<8x128xf32>
    %6 = math.exp %5 : vector<8x128xf32>
    %cst_3 = arith.constant dense<0.000000e+00> : vector<8xf32>
    %7 = vector.multi_reduction <add>, %6, %cst_3 [1] : vector<8x128xf32> to vector<8xf32>
    %8 = vector.shape_cast %7 : vector<8xf32> to vector<8x1xf32>
    %9 = math.log %8 : vector<8x1xf32>
    %10 = arith.addf %3, %9 : vector<8x1xf32>
    %cst_4 = arith.constant dense<0.000000e+00> : vector<8xf32>
    %11 = vector.multi_reduction <add>, %0, %cst_4 [1] : vector<8x128xf32> to vector<8xf32>
    %12 = vector.shape_cast %11 : vector<8xf32> to vector<8x1xf32>
    %13 = tpu.iota {dimensions = array<i32: 1>} : vector<8x128xi32>
    %14 = vector.broadcast %1 : vector<8x1xi32> to vector<8x128xi32>
    %15 = arith.cmpi eq, %13, %14 : vector<8x128xi32>
    %cst_5 = arith.constant 0.000000e+00 : f32
    %16 = vector.broadcast %cst_5 : f32 to vector<8x128xf32>
    %17 = arith.select %15, %0, %16 : vector<8x128xi1>, vector<8x128xf32>
    %cst_6 = arith.constant dense<0.000000e+00> : vector<8xf32>
    %18 = vector.multi_reduction <add>, %17, %cst_6 [1] : vector<8x128xf32> to vector<8xf32>
    %19 = vector.shape_cast %18 : vector<8xf32> to vector<8x1xf32>
    %20 = arith.subf %10, %19 : vector<8x1xf32>
    %cst_7 = arith.constant 1.280000e+02 : f32
    %21 = vector.broadcast %cst_7 : f32 to vector<8x1xf32>
    %22 = arith.mulf %21, %10 : vector<8x1xf32>
    %23 = arith.subf %12, %22 : vector<8x1xf32>
    %cst_8 = arith.constant 1.250000e-01 : f32
    %24 = vector.broadcast %cst_8 : f32 to vector<8x1xf32>
    %25 = arith.mulf %20, %24 : vector<8x1xf32>
    %cst_9 = arith.constant 9.76562514E-5 : f32
    %26 = vector.broadcast %cst_9 : f32 to vector<8x1xf32>
    %27 = arith.mulf %23, %26 : vector<8x1xf32>
    %28 = arith.addf %25, %27 : vector<8x1xf32>
    %c0_10 = arith.constant 0 : index
    %c0_11 = arith.constant 0 : index
    %29 = vector.load %arg3[%c0_10, %c0_11] : memref<8x1xf32, #tpu.memory_space<vmem>>, vector<8x1xf32>
    tpu.vector_store %arg3[%c0_10, %c0_11], %28 {strides = array<i32>} : memref<8x1xf32, #tpu.memory_space<vmem>>, vector<8x1xf32>,
    return
  }
  func.func @transform_0(%arg0: i32) -> (i32, i32) {
    %c0_i32 = arith.constant 0 : i32
    %c0_i32_0 = arith.constant 0 : i32
    return %arg0, %c0_i32 : i32, i32
  }
  func.func @transform_1(%arg0: i32) -> (i32, i32) {
    %c0_i32 = arith.constant 0 : i32
    %c0_i32_0 = arith.constant 0 : i32
    return %arg0, %c0_i32 : i32, i32
  }
  func.func @transform_2(%arg0: i32) -> (i32, i32) {
    %c0_i32 = arith.constant 0 : i32
    %c0_i32_0 = arith.constant 0 : i32
    return %arg0, %c0_i32 : i32, i32
  }
}

</mosaic_0001>

<llo_original>
// kernel: tpu_custom_call.1
$region0: #{tpu_custom_call.1}
  #allocation0 [shape = 'u32[]', space=smem, size = 0x4, offset = 0x4, fixed_abs, tag = 'smem constant byte address 0x4 - core index']
  #allocation1 [shape = 'u32[144,128]{1,0:T(1,128)}', space=vmem, size = 0x12000, scoped, tag = 'internal scratch']
  %s0 = inlined_call_operand.vmem [shape: f32[8,128], index: 0, kind: input, shape index: {}]
  %s1 = inlined_call_operand.vmem [shape: s32[8,1], index: 1, kind: input, shape index: {}]
  %s2 = inlined_call_operand.vmem [shape: f32[8,1], index: 2, kind: output, shape index: {}]
  %s3 = sld [smem:[#allocation0]]
  $region18: #{tpu_custom_call.1} parent=0
    _
  %s5 = ssub.s32 1, %s3
  %s6 = scalar_select 0, %s5, %s3
  // Predicated region
  $region2: #{tpu_custom_call.1} parent=0 // pred_check
    _
  $region3: #{tpu_custom_call.1} parent=0 // pred_check_branch
    %8 = sbr.rel (0) target = $region5
  $region4: #{tpu_custom_call.1} parent=0 // pred_region
    _
  $region5: #{tpu_custom_call.1} parent=0 // pred_fallthru
    _
  // Predicated region
  $region6: #{tpu_custom_call.1} parent=0 // pred_check
    _
  $region7: #{tpu_custom_call.1} parent=0 // pred_check_branch
    %10 = sbr.rel (0) target = $region9
  $region8: #{tpu_custom_call.1} parent=0 // pred_region
    _
  $region9: #{tpu_custom_call.1} parent=0 // pred_fallthru
    _
  %v11 = vld [vmem:[%s0] sm:$0xff]
  %v12 = vld [vmem:[%s1] sm:$0xff]
  %13 = vmax.xlane.f32.xlu0 %v11
  %v14 = vpop.xlane.xlu0 %13
  %v15 = vsub.f32 %v11, %v14
  %v16 = vmul.f32 %v15, 1.442695
  %v17 = vpow.pop %v16
  %18 = vadd.xlane.f32.xlu0 %v17
  %v19 = vpop.xlane.xlu0 %18
  %v20 = vlog2.pop %v19
  %v21 = vmul.f32 %v20, 0.6931472
  %v22 = vadd.f32 %v14, %v21
  %23 = vadd.xlane.f32.xlu0 %v11
  %v24 = vpop.xlane.xlu0 %23
  %v25 = vlaneseq
  %v26 = vand.u32 %v25, 127
  %27 = vset.pattern.permute.xlu0 0
  %28 = vperm.xlu0 %27, %v12
  %v29 = vpop.permute.xlu0 %28
  %vm30 = vcmp.eq.s32.totalorder %v26, %v29
  %v31 = vsel %vm30, %v11, 0.0
  %32 = vadd.xlane.f32.xlu0 %v31
  %v33 = vpop.xlane.xlu0 %32
  %v34 = vsub.f32 %v22, %v33
  %v35 = vmul.f32 %v22, 128.0
  %v36 = vsub.f32 %v24, %v35
  %v37 = vmul.f32 %v34, 0.125
  %v38 = vmul.f32 %v36, 9.765625e-05
  %v39 = vadd.f32 %v37, %v38
  %vm40 = vcmask 7168
  %41 = vst.msk [vmem:[%s2] sm:$0xff] %vm40, %v39
  // Predicated region
  $region10: #{tpu_custom_call.1} parent=0 // pred_check
    _
  $region11: #{tpu_custom_call.1} parent=0 // pred_check_branch
    %43 = sbr.rel (0) target = $region13
  $region12: #{tpu_custom_call.1} parent=0 // pred_region
    _
  $region13: #{tpu_custom_call.1} parent=0 // pred_fallthru
    _
  // Predicated region
  $region14: #{tpu_custom_call.1} parent=0 // pred_check
    _
  $region15: #{tpu_custom_call.1} parent=0 // pred_check_branch
    %45 = sbr.rel (0) target = $region17
  $region16: #{tpu_custom_call.1} parent=0 // pred_region
    _
  $region17: #{tpu_custom_call.1} parent=0 // pred_fallthru
    _

</llo_original>
